<compile_context>
chip_gen: v7x
topology: tpu7x:2x2x1
jax: 0.10.0
libtpu: 0.0.40
codegen_flags: <defaults>
</compile_context>

<pallas_src>
import functools

import jax
import jax.numpy as jnp
from jax.experimental import pallas as pl
from jax.experimental.pallas import tpu as pltpu

BN_EPS = 1e-5
_TARGET_STEP_BYTES = 8 * 1024 * 1024   # double-buffered x-in + att-out per step
_MXU_MIN_ROWS = 16                     # use MXU for the conv once B*C >= this


def _round_up(x, m):
    return ((x + m - 1) // m) * m


def _fused_kernel(w_ref, gb_ref, x_ref, att_ref, pool_ref,
                  s1_ref, s2_ref, ws_ref, shift_ref,
                  *, B, A, C, S, ts, inv_n, inv_s, use_mxu, mask_tail):
    p = pl.program_id(0)   # 0 = stats pass, 1 = apply pass
    t = pl.program_id(1)   # spatial tile

    x = x_ref[...]                                             # [BC, ts]
    if mask_tail:
        # Partial last tile: columns >= S hold unspecified data -> zero them
        # (zeros contribute exactly 0 to every sum below; conv bias is dropped).
        col = t * ts + jax.lax.broadcasted_iota(jnp.int32, x.shape, 1)
        x = jnp.where(col < S, x, 0.0)

    n_groups = 1 if use_mxu else B
    ga = (B * A) if use_mxu else A     # output rows per group
    gc = (B * C) if use_mxu else C     # input rows per group

    def group_conv(w_full, g):
        if use_mxu:
            # Block-diagonal weight on the MXU: zero blocks are free.
            return jnp.dot(w_full, x, preferred_element_type=jnp.float32)
        # Tiny-B*C path: VPU FMA over only the C nonzero columns of batch g.
        xg = x[g * C:(g + 1) * C, :]
        wg = w_full[g * A:(g + 1) * A, g * C:(g + 1) * C]
        acc = wg[:, 0:1] * xg[0:1, :]
        for c in range(1, C):
            acc = acc + wg[:, c:c + 1] * xg[c:c + 1, :]
        return acc                                             # [ga, ts]

    # ---------------- Phase 0: single-pass statistics ----------------
    @pl.when(p == 0)
    def _stats():
        @pl.when(t == 0)
        def _init():
            s1_ref[...] = jnp.zeros_like(s1_ref)
            s2_ref[...] = jnp.zeros_like(s2_ref)

        w = w_ref[...]
        for g in range(n_groups):
            conv = group_conv(w, g)
            s1_ref[g * ga:(g + 1) * ga, :] += jnp.sum(
                conv, axis=1, keepdims=True)
            s2_ref[g * ga:(g + 1) * ga, :] += jnp.sum(
                conv * conv, axis=1, keepdims=True)

    # -------- Phase 1, first tile: in-kernel BN fold (scale into weight) -----
    @pl.when((p == 1) & (t == 0))
    def _fold():
        s1 = s1_ref[...]                                        # [BA, 1]
        s2 = s2_ref[...]
        sum1 = s1[0:A, :]
        sum2 = s2[0:A, :]
        for b in range(1, B):                                   # combine batches
            sum1 = sum1 + s1[b * A:(b + 1) * A, :]
            sum2 = sum2 + s2[b * A:(b + 1) * A, :]
        mean = sum1 * inv_n                                     # [A, 1]
        var = jnp.maximum(sum2 * inv_n - mean * mean, 0.0)      # biased, clamped
        gamma = gb_ref[:, 0:1]                                  # [A, 1]
        beta = gb_ref[:, 1:2]
        scale = gamma * jax.lax.rsqrt(var + BN_EPS)             # [A, 1]
        shift = beta - mean * scale                             # [A, 1]
        w = w_ref[...]
        for b in range(B):
            shift_ref[b * A:(b + 1) * A, :] = shift
            ws_ref[b * A:(b + 1) * A, :] = w[b * A:(b + 1) * A, :] * scale
        pool_ref[...] = jnp.zeros_like(pool_ref)

    # ---------------- Phase 1: apply + attention maps + pooling --------------
    @pl.when(p == 1)
    def _apply():
        ws = ws_ref[...]
        for g in range(n_groups):
            conv = group_conv(ws, g)                            # scale pre-folded
            attg = jnp.maximum(conv + shift_ref[g * ga:(g + 1) * ga, :], 0.0)
            att_ref[g * ga:(g + 1) * ga, :] = attg
            xg = x[g * gc:(g + 1) * gc, :]
            pool_ref[g * gc:(g + 1) * gc, :] += (
                jnp.sum(xg * attg, axis=1, keepdims=True) * inv_s)


@jax.jit
def attention_framework(x_nchw, conv_w, conv_b, bn_gamma, bn_beta):
    """Forward pass of AttentionFramework (training-mode BatchNorm).

    x_nchw: [B, C, H, W]; conv_w: [A, C, 1, 1]; conv_b/bn_gamma/bn_beta: [A].
    Returns (pooled_features [B, C, 1, 1], attention_maps [B, A, H, W]).
    """
    B, C, H, W = x_nchw.shape
    A = conv_w.shape[0]
    assert A == C, "reference forward requires in_channels == attention_maps"
    del conv_b  # cancels exactly through train-mode BN mean subtraction
    S = H * W
    BC, BA = B * C, B * A

    # Packed, lane-dense layout: [B*C, S].
    x_flat = x_nchw.reshape(BC, S).astype(jnp.float32)
    if S % 128 == 0:
        x_in, s_in = x_flat, S                   # no wrapper-side pad pass
    else:
        s_in = _round_up(S, 128)
        x_in = jnp.pad(x_flat, ((0, 0), (0, s_in - S)))

    # Adaptive spatial tile: target ~_TARGET_STEP_BYTES of double-buffered
    # x-in + att-out traffic per grid step.
    bytes_per_col = 2 * 4 * (BC + BA)
    ts = max(128, (_TARGET_STEP_BYTES // bytes_per_col) // 128 * 128)
    ts = min(ts, s_in)
    nt = -(-s_in // ts)
    mask_tail = (s_in % ts) != 0

    use_mxu = BC >= _MXU_MIN_ROWS

    # Block-diagonal [BA, BC] weight (block (b, b) = conv weight [A, C]).
    w2 = conv_w.reshape(A, C).astype(jnp.float32)
    w_big = jnp.kron(jnp.eye(B, dtype=jnp.float32), w2)
    gb = jnp.stack([bn_gamma.reshape(A).astype(jnp.float32),
                    bn_beta.reshape(A).astype(jnp.float32)], axis=1)   # [A, 2]

    kernel = functools.partial(
        _fused_kernel, B=B, A=A, C=C, S=S, ts=ts,
        inv_n=1.0 / float(B * S), inv_s=1.0 / float(S),
        use_mxu=use_mxu, mask_tail=mask_tail)

    conv_mults = BA * BC if use_mxu else B * A * C
    cost = pl.CostEstimate(
        flops=2 * (2 * conv_mults * s_in) + 8 * BA * s_in,
        transcendentals=0,
        bytes_accessed=4 * (2 * BC * s_in + BA * S + BA * BC + BC + 2 * A))

    att, pool = pl.pallas_call(
        kernel,
        out_shape=(jax.ShapeDtypeStruct((BA, S), jnp.float32),
                   jax.ShapeDtypeStruct((BC, 1), jnp.float32)),
        grid=(2, nt),
        in_specs=[
            pl.BlockSpec((BA, BC), lambda p, t: (0, 0)),
            pl.BlockSpec((A, 2), lambda p, t: (0, 0)),
            pl.BlockSpec((BC, ts), lambda p, t: (0, t)),
        ],
        out_specs=(
            # During the stats phase (p == 0) the att block index stays 0, so
            # nothing is written back until phase 1 has produced real data.
            pl.BlockSpec((BA, ts), lambda p, t: (0, t * p)),
            pl.BlockSpec((BC, 1), lambda p, t: (0, 0)),
        ),
        scratch_shapes=[
            pltpu.VMEM((BA, 1), jnp.float32),    # s1 (conv sum)
            pltpu.VMEM((BA, 1), jnp.float32),    # s2 (conv sum of squares)
            pltpu.VMEM((BA, BC), jnp.float32),   # scale-folded weight
            pltpu.VMEM((BA, 1), jnp.float32),    # BN shift
        ],
        compiler_params=pltpu.CompilerParams(
            dimension_semantics=("arbitrary", "arbitrary"),
            vmem_limit_bytes=32 * 1024 * 1024),
        cost_estimate=cost,
    )(w_big, gb, x_in)

    attention_maps = att.reshape(B, A, H, W)
    pooled_features = pool.reshape(B, C, 1, 1)
    return pooled_features, attention_maps


def _reference_forward(x, conv_w, conv_b, gamma, beta):
    """Pure-JAX reference matching the PyTorch module (train-mode BN)."""
    B, C, H, W = x.shape
    A = conv_w.shape[0]
    w = conv_w.reshape(A, C)
    att = jnp.einsum("ac,bchw->bahw", w, x) + conv_b.reshape(1, A, 1, 1)
    mean = jnp.mean(att, axis=(0, 2, 3), keepdims=True)
    var = jnp.mean(jnp.square(att - mean), axis=(0, 2, 3), keepdims=True)
    att = (att - mean) * jax.lax.rsqrt(var + BN_EPS)
    att = att * gamma.reshape(1, A, 1, 1) + beta.reshape(1, A, 1, 1)
    att = jnp.maximum(att, 0.0)
    refined = x * att
    pooled = jnp.mean(refined, axis=(2, 3), keepdims=True)
    return pooled, att


if __name__ == "__main__":
    B, C_in, H, W = 2, 4, 16, 16
    A = 4  # attention_maps

    key = jax.random.PRNGKey(0)
    k_x, k_w, k_b = jax.random.split(key, 3)

    x = jax.random.normal(k_x, (B, C_in, H, W), dtype=jnp.float32)
    # Shapes match nn.Conv2d(C_in, A, 1) + nn.BatchNorm2d(A).
    conv_w = 0.1 * jax.random.normal(k_w, (A, C_in, 1, 1), dtype=jnp.float32)
    conv_b = 0.1 * jax.random.normal(k_b, (A,), dtype=jnp.float32)
    bn_gamma = 1.0 + 0.1 * jnp.arange(A, dtype=jnp.float32)
    bn_beta = 0.01 * jnp.arange(A, dtype=jnp.float32)

    pooled_features, attention_maps = attention_framework(
        x, conv_w, conv_b, bn_gamma, bn_beta)
    jax.block_until_ready((pooled_features, attention_maps))

    assert pooled_features.shape == (B, C_in, 1, 1)
    assert attention_maps.shape == (B, A, H, W)
    assert bool(jnp.all(attention_maps >= 0.0))  # ReLU output

    ref_pool, ref_att = _reference_forward(x, conv_w, conv_b, bn_gamma, bn_beta)
    assert bool(jnp.allclose(attention_maps, ref_att, rtol=1e-3, atol=1e-4)), \
        float(jnp.max(jnp.abs(attention_maps - ref_att)))
    assert bool(jnp.allclose(pooled_features, ref_pool, rtol=1e-3, atol=1e-4)), \
        float(jnp.max(jnp.abs(pooled_features - ref_pool)))
    print("KERNEL_OK")
</pallas_src>

<mosaic_0001>
module attributes {stable_mosaic.version = 11 : i64} {
  func.func @_fused_kernel(%arg0: i32, %arg1: i32, %arg2: memref<8x8xf32, #tpu.memory_space<vmem>>, %arg3: memref<4x2xf32, #tpu.memory_space<vmem>>, %arg4: memref<8x256xf32, #tpu.memory_space<vmem>>, %arg5: memref<8x256xf32, #tpu.memory_space<vmem>>, %arg6: memref<8x1xf32, #tpu.memory_space<vmem>>, %arg7: memref<8x1xf32, #tpu.memory_space<vmem>>, %arg8: memref<8x1xf32, #tpu.memory_space<vmem>>, %arg9: memref<8x8xf32, #tpu.memory_space<vmem>>, %arg10: memref<8x1xf32, #tpu.memory_space<vmem>>) attributes {dimension_semantics = [#tpu.dimension_semantics<arbitrary>, #tpu.dimension_semantics<arbitrary>], iteration_bounds = array<i64: 2, 1>, scalar_prefetch = 0 : i64, scratch_operands = 4 : i64, tpu.core_type = #tpu.core_type<tc>, window_params = [{pipeline_mode = #tpu.pipeline_mode<synchronous>, transform_indices = @transform_0, window_bounds = array<i64: 8, 8>}, {pipeline_mode = #tpu.pipeline_mode<synchronous>, transform_indices = @transform_1, window_bounds = array<i64: 4, 2>}, {transform_indices = @transform_2, window_bounds = array<i64: 8, 256>}, {transform_indices = @transform_3, window_bounds = array<i64: 8, 256>}, {pipeline_mode = #tpu.pipeline_mode<synchronous>, transform_indices = @transform_4, window_bounds = array<i64: 8, 1>}]} {
    %c0 = arith.constant 0 : index
    %c0_0 = arith.constant 0 : index
    %0 = vector.load %arg4[%c0, %c0_0] : memref<8x256xf32, #tpu.memory_space<vmem>>, vector<8x256xf32>
    %c0_i32 = arith.constant 0 : i32
    %1 = arith.cmpi eq, %arg0, %c0_i32 : i32
    %2 = arith.extui %1 : i1 to i32
    %c0_i32_1 = arith.constant 0 : i32
    %3 = arith.cmpi ne, %2, %c0_i32_1 : i32
    scf.if %3 {
      %c0_i32_6 = arith.constant 0 : i32
      %12 = arith.cmpi eq, %arg1, %c0_i32_6 : i32
      %13 = arith.extui %12 : i1 to i32
      %c0_i32_7 = arith.constant 0 : i32
      %14 = arith.cmpi ne, %13, %c0_i32_7 : i32
      scf.if %14 {
        %cst_28 = arith.constant 0.000000e+00 : f32
        %88 = vector.broadcast %cst_28 : f32 to vector<8x1xf32>
        %c0_29 = arith.constant 0 : index
        %c0_30 = arith.constant 0 : index
        %89 = vector.load %arg7[%c0_29, %c0_30] : memref<8x1xf32, #tpu.memory_space<vmem>>, vector<8x1xf32>
        tpu.vector_store %arg7[%c0_29, %c0_30], %88 {strides = array<i32>} : memref<8x1xf32, #tpu.memory_space<vmem>>, vector<8x1xf32>,
        %cst_31 = arith.constant 0.000000e+00 : f32
        %90 = vector.broadcast %cst_31 : f32 to vector<8x1xf32>
        %c0_32 = arith.constant 0 : index
        %c0_33 = arith.constant 0 : index
        %91 = vector.load %arg8[%c0_32, %c0_33] : memref<8x1xf32, #tpu.memory_space<vmem>>, vector<8x1xf32>
        tpu.vector_store %arg8[%c0_32, %c0_33], %90 {strides = array<i32>} : memref<8x1xf32, #tpu.memory_space<vmem>>, vector<8x1xf32>,
      } else {
      }
      %c0_8 = arith.constant 0 : index
      %c0_9 = arith.constant 0 : index
      %15 = vector.load %arg2[%c0_8, %c0_9] : memref<8x8xf32, #tpu.memory_space<vmem>>, vector<8x8xf32>
      %16 = vector.extract_strided_slice %0 {offsets = [0, 0], sizes = [4, 256], strides = [1, 1]} : vector<8x256xf32> to vector<4x256xf32>
      %17 = vector.extract_strided_slice %15 {offsets = [0, 0], sizes = [4, 4], strides = [1, 1]} : vector<8x8xf32> to vector<4x4xf32>
      %18 = vector.extract_strided_slice %17 {offsets = [0, 0], sizes = [4, 1], strides = [1, 1]} : vector<4x4xf32> to vector<4x1xf32>
      %19 = vector.extract_strided_slice %16 {offsets = [0, 0], sizes = [1, 256], strides = [1, 1]} : vector<4x256xf32> to vector<1x256xf32>
      %20 = vector.broadcast %18 : vector<4x1xf32> to vector<4x256xf32>
      %21 = vector.broadcast %19 : vector<1x256xf32> to vector<4x256xf32>
      %22 = arith.mulf %20, %21 : vector<4x256xf32>
      %23 = vector.extract_strided_slice %17 {offsets = [0, 1], sizes = [4, 1], strides = [1, 1]} : vector<4x4xf32> to vector<4x1xf32>
      %24 = vector.extract_strided_slice %16 {offsets = [1, 0], sizes = [1, 256], strides = [1, 1]} : vector<4x256xf32> to vector<1x256xf32>
      %25 = vector.broadcast %23 : vector<4x1xf32> to vector<4x256xf32>
      %26 = vector.broadcast %24 : vector<1x256xf32> to vector<4x256xf32>
      %27 = arith.mulf %25, %26 : vector<4x256xf32>
      %28 = arith.addf %22, %27 : vector<4x256xf32>
      %29 = vector.extract_strided_slice %17 {offsets = [0, 2], sizes = [4, 1], strides = [1, 1]} : vector<4x4xf32> to vector<4x1xf32>
      %30 = vector.extract_strided_slice %16 {offsets = [2, 0], sizes = [1, 256], strides = [1, 1]} : vector<4x256xf32> to vector<1x256xf32>
      %31 = vector.broadcast %29 : vector<4x1xf32> to vector<4x256xf32>
      %32 = vector.broadcast %30 : vector<1x256xf32> to vector<4x256xf32>
      %33 = arith.mulf %31, %32 : vector<4x256xf32>
      %34 = arith.addf %28, %33 : vector<4x256xf32>
      %35 = vector.extract_strided_slice %17 {offsets = [0, 3], sizes = [4, 1], strides = [1, 1]} : vector<4x4xf32> to vector<4x1xf32>
      %36 = vector.extract_strided_slice %16 {offsets = [3, 0], sizes = [1, 256], strides = [1, 1]} : vector<4x256xf32> to vector<1x256xf32>
      %37 = vector.broadcast %35 : vector<4x1xf32> to vector<4x256xf32>
      %38 = vector.broadcast %36 : vector<1x256xf32> to vector<4x256xf32>
      %39 = arith.mulf %37, %38 : vector<4x256xf32>
      %40 = arith.addf %34, %39 : vector<4x256xf32>
      %c0_10 = arith.constant 0 : index
      %c0_11 = arith.constant 0 : index
      %41 = vector.load %arg7[%c0_10, %c0_11] : memref<8x1xf32, #tpu.memory_space<vmem>>, vector<4x1xf32>
      %cst = arith.constant dense<0.000000e+00> : vector<4xf32>
      %42 = vector.multi_reduction <add>, %40, %cst [1] : vector<4x256xf32> to vector<4xf32>
      %43 = vector.shape_cast %42 : vector<4xf32> to vector<4x1xf32>
      %44 = arith.addf %41, %43 : vector<4x1xf32>
      %c0_12 = arith.constant 0 : index
      %c0_13 = arith.constant 0 : index
      %45 = vector.load %arg7[%c0_12, %c0_13] : memref<8x1xf32, #tpu.memory_space<vmem>>, vector<4x1xf32>
      tpu.vector_store %arg7[%c0_12, %c0_13], %44 {strides = array<i32>} : memref<8x1xf32, #tpu.memory_space<vmem>>, vector<4x1xf32>,
      %c0_14 = arith.constant 0 : index
      %c0_15 = arith.constant 0 : index
      %46 = vector.load %arg8[%c0_14, %c0_15] : memref<8x1xf32, #tpu.memory_space<vmem>>, vector<4x1xf32>
      %47 = arith.mulf %40, %40 : vector<4x256xf32>
      %cst_16 = arith.constant dense<0.000000e+00> : vector<4xf32>
      %48 = vector.multi_reduction <add>, %47, %cst_16 [1] : vector<4x256xf32> to vector<4xf32>
      %49 = vector.shape_cast %48 : vector<4xf32> to vector<4x1xf32>
      %50 = arith.addf %46, %49 : vector<4x1xf32>
      %c0_17 = arith.constant 0 : index
      %c0_18 = arith.constant 0 : index
      %51 = vector.load %arg8[%c0_17, %c0_18] : memref<8x1xf32, #tpu.memory_space<vmem>>, vector<4x1xf32>
      tpu.vector_store %arg8[%c0_17, %c0_18], %50 {strides = array<i32>} : memref<8x1xf32, #tpu.memory_space<vmem>>, vector<4x1xf32>,
      %52 = vector.extract_strided_slice %0 {offsets = [4, 0], sizes = [4, 256], strides = [1, 1]} : vector<8x256xf32> to vector<4x256xf32>
      %53 = vector.extract_strided_slice %15 {offsets = [4, 4], sizes = [4, 4], strides = [1, 1]} : vector<8x8xf32> to vector<4x4xf32>
      %54 = vector.extract_strided_slice %53 {offsets = [0, 0], sizes = [4, 1], strides = [1, 1]} : vector<4x4xf32> to vector<4x1xf32>
      %55 = vector.extract_strided_slice %52 {offsets = [0, 0], sizes = [1, 256], strides = [1, 1]} : vector<4x256xf32> to vector<1x256xf32>
      %56 = vector.broadcast %54 : vector<4x1xf32> to vector<4x256xf32>
      %57 = vector.broadcast %55 : vector<1x256xf32> to vector<4x256xf32>
      %58 = arith.mulf %56, %57 : vector<4x256xf32>
      %59 = vector.extract_strided_slice %53 {offsets = [0, 1], sizes = [4, 1], strides = [1, 1]} : vector<4x4xf32> to vector<4x1xf32>
      %60 = vector.extract_strided_slice %52 {offsets = [1, 0], sizes = [1, 256], strides = [1, 1]} : vector<4x256xf32> to vector<1x256xf32>
      %61 = vector.broadcast %59 : vector<4x1xf32> to vector<4x256xf32>
      %62 = vector.broadcast %60 : vector<1x256xf32> to vector<4x256xf32>
      %63 = arith.mulf %61, %62 : vector<4x256xf32>
      %64 = arith.addf %58, %63 : vector<4x256xf32>
      %65 = vector.extract_strided_slice %53 {offsets = [0, 2], sizes = [4, 1], strides = [1, 1]} : vector<4x4xf32> to vector<4x1xf32>
      %66 = vector.extract_strided_slice %52 {offsets = [2, 0], sizes = [1, 256], strides = [1, 1]} : vector<4x256xf32> to vector<1x256xf32>
      %67 = vector.broadcast %65 : vector<4x1xf32> to vector<4x256xf32>
      %68 = vector.broadcast %66 : vector<1x256xf32> to vector<4x256xf32>
      %69 = arith.mulf %67, %68 : vector<4x256xf32>
      %70 = arith.addf %64, %69 : vector<4x256xf32>
      %71 = vector.extract_strided_slice %53 {offsets = [0, 3], sizes = [4, 1], strides = [1, 1]} : vector<4x4xf32> to vector<4x1xf32>
      %72 = vector.extract_strided_slice %52 {offsets = [3, 0], sizes = [1, 256], strides = [1, 1]} : vector<4x256xf32> to vector<1x256xf32>
      %73 = vector.broadcast %71 : vector<4x1xf32> to vector<4x256xf32>
      %74 = vector.broadcast %72 : vector<1x256xf32> to vector<4x256xf32>
      %75 = arith.mulf %73, %74 : vector<4x256xf32>
      %76 = arith.addf %70, %75 : vector<4x256xf32>
      %c4 = arith.constant 4 : index
      %c0_19 = arith.constant 0 : index
      %77 = vector.load %arg7[%c4, %c0_19] : memref<8x1xf32, #tpu.memory_space<vmem>>, vector<4x1xf32>
      %cst_20 = arith.constant dense<0.000000e+00> : vector<4xf32>
      %78 = vector.multi_reduction <add>, %76, %cst_20 [1] : vector<4x256xf32> to vector<4xf32>
      %79 = vector.shape_cast %78 : vector<4xf32> to vector<4x1xf32>
      %80 = arith.addf %77, %79 : vector<4x1xf32>
      %c4_21 = arith.constant 4 : index
      %c0_22 = arith.constant 0 : index
      %81 = vector.load %arg7[%c4_21, %c0_22] : memref<8x1xf32, #tpu.memory_space<vmem>>, vector<4x1xf32>
      tpu.vector_store %arg7[%c4_21, %c0_22], %80 {strides = array<i32>} : memref<8x1xf32, #tpu.memory_space<vmem>>, vector<4x1xf32>,
      %c4_23 = arith.constant 4 : index
      %c0_24 = arith.constant 0 : index
      %82 = vector.load %arg8[%c4_23, %c0_24] : memref<8x1xf32, #tpu.memory_space<vmem>>, vector<4x1xf32>
      %83 = arith.mulf %76, %76 : vector<4x256xf32>
      %cst_25 = arith.constant dense<0.000000e+00> : vector<4xf32>
      %84 = vector.multi_reduction <add>, %83, %cst_25 [1] : vector<4x256xf32> to vector<4xf32>
      %85 = vector.shape_cast %84 : vector<4xf32> to vector<4x1xf32>
      %86 = arith.addf %82, %85 : vector<4x1xf32>
      %c4_26 = arith.constant 4 : index
      %c0_27 = arith.constant 0 : index
      %87 = vector.load %arg8[%c4_26, %c0_27] : memref<8x1xf32, #tpu.memory_space<vmem>>, vector<4x1xf32>
      tpu.vector_store %arg8[%c4_26, %c0_27], %86 {strides = array<i32>} : memref<8x1xf32, #tpu.memory_space<vmem>>, vector<4x1xf32>,
    } else {
    }
    %c1_i32 = arith.constant 1 : i32
    %4 = arith.cmpi eq, %arg0, %c1_i32 : i32
    %c0_i32_2 = arith.constant 0 : i32
    %5 = arith.cmpi eq, %arg1, %c0_i32_2 : i32
    %6 = arith.andi %4, %5 : i1
    %7 = arith.extui %6 : i1 to i32
    %c0_i32_3 = arith.constant 0 : i32
    %8 = arith.cmpi ne, %7, %c0_i32_3 : i32
    scf.if %8 {
      %c0_6 = arith.constant 0 : index
      %c0_7 = arith.constant 0 : index
      %12 = vector.load %arg7[%c0_6, %c0_7] : memref<8x1xf32, #tpu.memory_space<vmem>>, vector<8x1xf32>
      %c0_8 = arith.constant 0 : index
      %c0_9 = arith.constant 0 : index
      %13 = vector.load %arg8[%c0_8, %c0_9] : memref<8x1xf32, #tpu.memory_space<vmem>>, vector<8x1xf32>
      %14 = vector.extract_strided_slice %12 {offsets = [0, 0], sizes = [4, 1], strides = [1, 1]} : vector<8x1xf32> to vector<4x1xf32>
      %15 = vector.extract_strided_slice %13 {offsets = [0, 0], sizes = [4, 1], strides = [1, 1]} : vector<8x1xf32> to vector<4x1xf32>
      %16 = vector.extract_strided_slice %12 {offsets = [4, 0], sizes = [4, 1], strides = [1, 1]} : vector<8x1xf32> to vector<4x1xf32>
      %17 = arith.addf %14, %16 : vector<4x1xf32>
      %18 = vector.extract_strided_slice %13 {offsets = [4, 0], sizes = [4, 1], strides = [1, 1]} : vector<8x1xf32> to vector<4x1xf32>
      %19 = arith.addf %15, %18 : vector<4x1xf32>
      %cst = arith.constant 0.001953125 : f32
      %20 = vector.broadcast %cst : f32 to vector<4x1xf32>
      %21 = arith.mulf %17, %20 : vector<4x1xf32>
      %cst_10 = arith.constant 0.001953125 : f32
      %22 = vector.broadcast %cst_10 : f32 to vector<4x1xf32>
      %23 = arith.mulf %19, %22 : vector<4x1xf32>
      %24 = arith.mulf %21, %21 : vector<4x1xf32>
      %25 = arith.subf %23, %24 : vector<4x1xf32>
      %cst_11 = arith.constant 0.000000e+00 : f32
      %26 = vector.broadcast %cst_11 : f32 to vector<4x1xf32>
      %27 = arith.maximumf %25, %26 : vector<4x1xf32>
      %c0_12 = arith.constant 0 : index
      %c0_13 = arith.constant 0 : index
      %28 = vector.load %arg3[%c0_12, %c0_13] : memref<4x2xf32, #tpu.memory_space<vmem>>, vector<4x1xf32>
      %c0_14 = arith.constant 0 : index
      %c1 = arith.constant 1 : index
      %29 = vector.load %arg3[%c0_14, %c1] : memref<4x2xf32, #tpu.memory_space<vmem>>, vector<4x1xf32>
      %cst_15 = arith.constant 9.99999974E-6 : f32
      %30 = vector.broadcast %cst_15 : f32 to vector<4x1xf32>
      %31 = arith.addf %27, %30 : vector<4x1xf32>
      %32 = math.rsqrt %31 : vector<4x1xf32>
      %33 = arith.mulf %28, %32 : vector<4x1xf32>
      %34 = arith.mulf %21, %33 : vector<4x1xf32>
      %35 = arith.subf %29, %34 : vector<4x1xf32>
      %c0_16 = arith.constant 0 : index
      %c0_17 = arith.constant 0 : index
      %36 = vector.load %arg2[%c0_16, %c0_17] : memref<8x8xf32, #tpu.memory_space<vmem>>, vector<8x8xf32>
      %c0_18 = arith.constant 0 : index
      %c0_19 = arith.constant 0 : index
      %37 = vector.load %arg10[%c0_18, %c0_19] : memref<8x1xf32, #tpu.memory_space<vmem>>, vector<4x1xf32>
      tpu.vector_store %arg10[%c0_18, %c0_19], %35 {strides = array<i32>} : memref<8x1xf32, #tpu.memory_space<vmem>>, vector<4x1xf32>,
      %38 = vector.extract_strided_slice %36 {offsets = [0, 0], sizes = [4, 8], strides = [1, 1]} : vector<8x8xf32> to vector<4x8xf32>
      %39 = vector.broadcast %33 : vector<4x1xf32> to vector<4x8xf32>
      %40 = arith.mulf %38, %39 : vector<4x8xf32>
      %c0_20 = arith.constant 0 : index
      %c0_21 = arith.constant 0 : index
      %41 = vector.load %arg9[%c0_20, %c0_21] : memref<8x8xf32, #tpu.memory_space<vmem>>, vector<4x8xf32>
      tpu.vector_store %arg9[%c0_20, %c0_21], %40 {strides = array<i32>} : memref<8x8xf32, #tpu.memory_space<vmem>>, vector<4x8xf32>,
      %c4 = arith.constant 4 : index
      %c0_22 = arith.constant 0 : index
      %42 = vector.load %arg10[%c4, %c0_22] : memref<8x1xf32, #tpu.memory_space<vmem>>, vector<4x1xf32>
      tpu.vector_store %arg10[%c4, %c0_22], %35 {strides = array<i32>} : memref<8x1xf32, #tpu.memory_space<vmem>>, vector<4x1xf32>,
      %43 = vector.extract_strided_slice %36 {offsets = [4, 0], sizes = [4, 8], strides = [1, 1]} : vector<8x8xf32> to vector<4x8xf32>
      %44 = vector.broadcast %33 : vector<4x1xf32> to vector<4x8xf32>
      %45 = arith.mulf %43, %44 : vector<4x8xf32>
      %c4_23 = arith.constant 4 : index
      %c0_24 = arith.constant 0 : index
      %46 = vector.load %arg9[%c4_23, %c0_24] : memref<8x8xf32, #tpu.memory_space<vmem>>, vector<4x8xf32>
      tpu.vector_store %arg9[%c4_23, %c0_24], %45 {strides = array<i32>} : memref<8x8xf32, #tpu.memory_space<vmem>>, vector<4x8xf32>,
      %cst_25 = arith.constant 0.000000e+00 : f32
      %47 = vector.broadcast %cst_25 : f32 to vector<8x1xf32>
      %c0_26 = arith.constant 0 : index
      %c0_27 = arith.constant 0 : index
      %48 = vector.load %arg6[%c0_26, %c0_27] : memref<8x1xf32, #tpu.memory_space<vmem>>, vector<8x1xf32>
      tpu.vector_store %arg6[%c0_26, %c0_27], %47 {strides = array<i32>} : memref<8x1xf32, #tpu.memory_space<vmem>>, vector<8x1xf32>,
    } else {
    }
    %c1_i32_4 = arith.constant 1 : i32
    %9 = arith.cmpi eq, %arg0, %c1_i32_4 : i32
    %10 = arith.extui %9 : i1 to i32
    %c0_i32_5 = arith.constant 0 : i32
    %11 = arith.cmpi ne, %10, %c0_i32_5 : i32
    scf.if %11 {
      %c0_6 = arith.constant 0 : index
      %c0_7 = arith.constant 0 : index
      %12 = vector.load %arg9[%c0_6, %c0_7] : memref<8x8xf32, #tpu.memory_space<vmem>>, vector<8x8xf32>
      %13 = vector.extract_strided_slice %0 {offsets = [0, 0], sizes = [4, 256], strides = [1, 1]} : vector<8x256xf32> to vector<4x256xf32>
      %14 = vector.extract_strided_slice %12 {offsets = [0, 0], sizes = [4, 4], strides = [1, 1]} : vector<8x8xf32> to vector<4x4xf32>
      %15 = vector.extract_strided_slice %14 {offsets = [0, 0], sizes = [4, 1], strides = [1, 1]} : vector<4x4xf32> to vector<4x1xf32>
      %16 = vector.extract_strided_slice %13 {offsets = [0, 0], sizes = [1, 256], strides = [1, 1]} : vector<4x256xf32> to vector<1x256xf32>
      %17 = vector.broadcast %15 : vector<4x1xf32> to vector<4x256xf32>
      %18 = vector.broadcast %16 : vector<1x256xf32> to vector<4x256xf32>
      %19 = arith.mulf %17, %18 : vector<4x256xf32>
      %20 = vector.extract_strided_slice %14 {offsets = [0, 1], sizes = [4, 1], strides = [1, 1]} : vector<4x4xf32> to vector<4x1xf32>
      %21 = vector.extract_strided_slice %13 {offsets = [1, 0], sizes = [1, 256], strides = [1, 1]} : vector<4x256xf32> to vector<1x256xf32>
      %22 = vector.broadcast %20 : vector<4x1xf32> to vector<4x256xf32>
      %23 = vector.broadcast %21 : vector<1x256xf32> to vector<4x256xf32>
      %24 = arith.mulf %22, %23 : vector<4x256xf32>
      %25 = arith.addf %19, %24 : vector<4x256xf32>
      %26 = vector.extract_strided_slice %14 {offsets = [0, 2], sizes = [4, 1], strides = [1, 1]} : vector<4x4xf32> to vector<4x1xf32>
      %27 = vector.extract_strided_slice %13 {offsets = [2, 0], sizes = [1, 256], strides = [1, 1]} : vector<4x256xf32> to vector<1x256xf32>
      %28 = vector.broadcast %26 : vector<4x1xf32> to vector<4x256xf32>
      %29 = vector.broadcast %27 : vector<1x256xf32> to vector<4x256xf32>
      %30 = arith.mulf %28, %29 : vector<4x256xf32>
      %31 = arith.addf %25, %30 : vector<4x256xf32>
      %32 = vector.extract_strided_slice %14 {offsets = [0, 3], sizes = [4, 1], strides = [1, 1]} : vector<4x4xf32> to vector<4x1xf32>
      %33 = vector.extract_strided_slice %13 {offsets = [3, 0], sizes = [1, 256], strides = [1, 1]} : vector<4x256xf32> to vector<1x256xf32>
      %34 = vector.broadcast %32 : vector<4x1xf32> to vector<4x256xf32>
      %35 = vector.broadcast %33 : vector<1x256xf32> to vector<4x256xf32>
      %36 = arith.mulf %34, %35 : vector<4x256xf32>
      %37 = arith.addf %31, %36 : vector<4x256xf32>
      %c0_8 = arith.constant 0 : index
      %c0_9 = arith.constant 0 : index
      %38 = vector.load %arg10[%c0_8, %c0_9] : memref<8x1xf32, #tpu.memory_space<vmem>>, vector<4x1xf32>
      %39 = vector.broadcast %38 : vector<4x1xf32> to vector<4x256xf32>
      %40 = arith.addf %37, %39 : vector<4x256xf32>
      %cst = arith.constant 0.000000e+00 : f32
      %41 = vector.broadcast %cst : f32 to vector<4x256xf32>
      %42 = arith.maximumf %40, %41 : vector<4x256xf32>
      %c0_10 = arith.constant 0 : index
      %c0_11 = arith.constant 0 : index
      %43 = vector.load %arg5[%c0_10, %c0_11] : memref<8x256xf32, #tpu.memory_space<vmem>>, vector<4x256xf32>
      tpu.vector_store %arg5[%c0_10, %c0_11], %42 {strides = array<i32>} : memref<8x256xf32, #tpu.memory_space<vmem>>, vector<4x256xf32>,
      %44 = vector.extract_strided_slice %0 {offsets = [0, 0], sizes = [4, 256], strides = [1, 1]} : vector<8x256xf32> to vector<4x256xf32>
      %c0_12 = arith.constant 0 : index
      %c0_13 = arith.constant 0 : index
      %45 = vector.load %arg6[%c0_12, %c0_13] : memref<8x1xf32, #tpu.memory_space<vmem>>, vector<4x1xf32>
      %46 = arith.mulf %44, %42 : vector<4x256xf32>
      %cst_14 = arith.constant dense<0.000000e+00> : vector<4xf32>
      %47 = vector.multi_reduction <add>, %46, %cst_14 [1] : vector<4x256xf32> to vector<4xf32>
      %48 = vector.shape_cast %47 : vector<4xf32> to vector<4x1xf32>
      %cst_15 = arith.constant 3.906250e-03 : f32
      %49 = vector.broadcast %cst_15 : f32 to vector<4x1xf32>
      %50 = arith.mulf %48, %49 : vector<4x1xf32>
      %51 = arith.addf %45, %50 : vector<4x1xf32>
      %c0_16 = arith.constant 0 : index
      %c0_17 = arith.constant 0 : index
      %52 = vector.load %arg6[%c0_16, %c0_17] : memref<8x1xf32, #tpu.memory_space<vmem>>, vector<4x1xf32>
      tpu.vector_store %arg6[%c0_16, %c0_17], %51 {strides = array<i32>} : memref<8x1xf32, #tpu.memory_space<vmem>>, vector<4x1xf32>,
      %53 = vector.extract_strided_slice %0 {offsets = [4, 0], sizes = [4, 256], strides = [1, 1]} : vector<8x256xf32> to vector<4x256xf32>
      %54 = vector.extract_strided_slice %12 {offsets = [4, 4], sizes = [4, 4], strides = [1, 1]} : vector<8x8xf32> to vector<4x4xf32>
      %55 = vector.extract_strided_slice %54 {offsets = [0, 0], sizes = [4, 1], strides = [1, 1]} : vector<4x4xf32> to vector<4x1xf32>
      %56 = vector.extract_strided_slice %53 {offsets = [0, 0], sizes = [1, 256], strides = [1, 1]} : vector<4x256xf32> to vector<1x256xf32>
      %57 = vector.broadcast %55 : vector<4x1xf32> to vector<4x256xf32>
      %58 = vector.broadcast %56 : vector<1x256xf32> to vector<4x256xf32>
      %59 = arith.mulf %57, %58 : vector<4x256xf32>
      %60 = vector.extract_strided_slice %54 {offsets = [0, 1], sizes = [4, 1], strides = [1, 1]} : vector<4x4xf32> to vector<4x1xf32>
      %61 = vector.extract_strided_slice %53 {offsets = [1, 0], sizes = [1, 256], strides = [1, 1]} : vector<4x256xf32> to vector<1x256xf32>
      %62 = vector.broadcast %60 : vector<4x1xf32> to vector<4x256xf32>
      %63 = vector.broadcast %61 : vector<1x256xf32> to vector<4x256xf32>
      %64 = arith.mulf %62, %63 : vector<4x256xf32>
      %65 = arith.addf %59, %64 : vector<4x256xf32>
      %66 = vector.extract_strided_slice %54 {offsets = [0, 2], sizes = [4, 1], strides = [1, 1]} : vector<4x4xf32> to vector<4x1xf32>
      %67 = vector.extract_strided_slice %53 {offsets = [2, 0], sizes = [1, 256], strides = [1, 1]} : vector<4x256xf32> to vector<1x256xf32>
      %68 = vector.broadcast %66 : vector<4x1xf32> to vector<4x256xf32>
      %69 = vector.broadcast %67 : vector<1x256xf32> to vector<4x256xf32>
      %70 = arith.mulf %68, %69 : vector<4x256xf32>
      %71 = arith.addf %65, %70 : vector<4x256xf32>
      %72 = vector.extract_strided_slice %54 {offsets = [0, 3], sizes = [4, 1], strides = [1, 1]} : vector<4x4xf32> to vector<4x1xf32>
      %73 = vector.extract_strided_slice %53 {offsets = [3, 0], sizes = [1, 256], strides = [1, 1]} : vector<4x256xf32> to vector<1x256xf32>
      %74 = vector.broadcast %72 : vector<4x1xf32> to vector<4x256xf32>
      %75 = vector.broadcast %73 : vector<1x256xf32> to vector<4x256xf32>
      %76 = arith.mulf %74, %75 : vector<4x256xf32>
      %77 = arith.addf %71, %76 : vector<4x256xf32>
      %c4 = arith.constant 4 : index
      %c0_18 = arith.constant 0 : index
      %78 = vector.load %arg10[%c4, %c0_18] : memref<8x1xf32, #tpu.memory_space<vmem>>, vector<4x1xf32>
      %79 = vector.broadcast %78 : vector<4x1xf32> to vector<4x256xf32>
      %80 = arith.addf %77, %79 : vector<4x256xf32>
      %cst_19 = arith.constant 0.000000e+00 : f32
      %81 = vector.broadcast %cst_19 : f32 to vector<4x256xf32>
      %82 = arith.maximumf %80, %81 : vector<4x256xf32>
      %c4_20 = arith.constant 4 : index
      %c0_21 = arith.constant 0 : index
      %83 = vector.load %arg5[%c4_20, %c0_21] : memref<8x256xf32, #tpu.memory_space<vmem>>, vector<4x256xf32>
      tpu.vector_store %arg5[%c4_20, %c0_21], %82 {strides = array<i32>} : memref<8x256xf32, #tpu.memory_space<vmem>>, vector<4x256xf32>,
      %84 = vector.extract_strided_slice %0 {offsets = [4, 0], sizes = [4, 256], strides = [1, 1]} : vector<8x256xf32> to vector<4x256xf32>
      %c4_22 = arith.constant 4 : index
      %c0_23 = arith.constant 0 : index
      %85 = vector.load %arg6[%c4_22, %c0_23] : memref<8x1xf32, #tpu.memory_space<vmem>>, vector<4x1xf32>
      %86 = arith.mulf %84, %82 : vector<4x256xf32>
      %cst_24 = arith.constant dense<0.000000e+00> : vector<4xf32>
      %87 = vector.multi_reduction <add>, %86, %cst_24 [1] : vector<4x256xf32> to vector<4xf32>
      %88 = vector.shape_cast %87 : vector<4xf32> to vector<4x1xf32>
      %cst_25 = arith.constant 3.906250e-03 : f32
      %89 = vector.broadcast %cst_25 : f32 to vector<4x1xf32>
      %90 = arith.mulf %88, %89 : vector<4x1xf32>
      %91 = arith.addf %85, %90 : vector<4x1xf32>
      %c4_26 = arith.constant 4 : index
      %c0_27 = arith.constant 0 : index
      %92 = vector.load %arg6[%c4_26, %c0_27] : memref<8x1xf32, #tpu.memory_space<vmem>>, vector<4x1xf32>
      tpu.vector_store %arg6[%c4_26, %c0_27], %91 {strides = array<i32>} : memref<8x1xf32, #tpu.memory_space<vmem>>, vector<4x1xf32>,
    } else {
    }
    return
  }
  func.func @transform_0(%arg0: i32, %arg1: i32) -> (i32, i32) {
    %c0_i32 = arith.constant 0 : i32
    %c0_i32_0 = arith.constant 0 : i32
    %c0_i32_1 = arith.constant 0 : i32
    return %c0_i32, %c0_i32_0 : i32, i32
  }
  func.func @transform_1(%arg0: i32, %arg1: i32) -> (i32, i32) {
    %c0_i32 = arith.constant 0 : i32
    %c0_i32_0 = arith.constant 0 : i32
    %c0_i32_1 = arith.constant 0 : i32
    return %c0_i32, %c0_i32_0 : i32, i32
  }
  func.func @transform_2(%arg0: i32, %arg1: i32) -> (i32, i32) {
    %c0_i32 = arith.constant 0 : i32
    %c0_i32_0 = arith.constant 0 : i32
    return %c0_i32, %arg1 : i32, i32
  }
  func.func @transform_3(%arg0: i32, %arg1: i32) -> (i32, i32) {
    %0 = arith.muli %arg1, %arg0 : i32
    %c0_i32 = arith.constant 0 : i32
    %c0_i32_0 = arith.constant 0 : i32
    return %c0_i32, %0 : i32, i32
  }
  func.func @transform_4(%arg0: i32, %arg1: i32) -> (i32, i32) {
    %c0_i32 = arith.constant 0 : i32
    %c0_i32_0 = arith.constant 0 : i32
    %c0_i32_1 = arith.constant 0 : i32
    return %c0_i32, %c0_i32_0 : i32, i32
  }
}

</mosaic_0001>

<llo_original>
// kernel: attention_framework.1
$region0: #{attention_framework.1}
  #allocation0 [shape = 'u32[]', space=smem, size = 0x4, offset = 0x4, fixed_abs, tag = 'smem constant byte address 0x4 - core index']
  #allocation1 [shape = 'u32[144,128]{1,0:T(1,128)}', space=vmem, size = 0x12000, scoped, tag = 'internal scratch']
  #allocation2 [shape = 'f32[8,1]{1,0:T(8,128)}', space=vmem, size = 0x1000, scoped, tag = 'scratch operand']
  #allocation3 [shape = 'f32[8,1]{1,0:T(8,128)}', space=vmem, size = 0x1000, scoped, tag = 'scratch operand']
  #allocation4 [shape = 'f32[8,8]{1,0:T(8,128)}', space=vmem, size = 0x1000, scoped, tag = 'scratch operand']
  #allocation5 [shape = 'f32[8,1]{1,0:T(8,128)}', space=vmem, size = 0x1000, scoped, tag = 'scratch operand']
  %s0 = inlined_call_operand.vmem [shape: f32[8,8], index: 0, kind: input, shape index: {}]
  %s1 = inlined_call_operand.vmem [shape: f32[4,2], index: 1, kind: input, shape index: {}]
  %s2 = inlined_call_operand.vmem [shape: f32[8,256], index: 2, kind: input, shape index: {}]
  %s3 = inlined_call_operand.vmem [shape: f32[8,256], index: 3, kind: output, shape index: {0}]
  %s4 = inlined_call_operand.vmem [shape: f32[8,1], index: 4, kind: output, shape index: {1}]
  %5 = xla_tuple %s3, %s4
  %s6 = sld [smem:[#allocation0]]
  $region69: #{attention_framework.1} parent=0
    _
  %s8 = ssub.s32 1, %s6
  %s9 = scalar_select 0, %s8, %s6
  loop: start=0, step=1, limit=4
  $region2: #{attention_framework.1} parent=0 // loop_pre_header
    _
  $region3: #{attention_framework.1} parent=0 // loop_header
    %s11 = sphi 0, %s15
    %p12 = scmp.ge.s32.totalorder %s11, 4
    %s18 = sphi 0, %s30
    %s19 = sphi 0, %s26
    %s20 = sphi 0, %s18
    %s21 = sphi 0, %s19
    %s22 = sphi 0, %s20
    %s23 = sphi 0, %s21
    %s31 = sphi 0, %s31
    %s33 = sphi 0, %s31
    %s34 = sphi 0, %s33
    %s48 = sphi 0, %s34
    %s52 = sphi 0, %s52
    %s54 = sphi 0, %s52
    %s55 = sphi 0, %s54
    %s69 = sphi 0, %s55
    %s75 = sphi 0, %s77
    %s78 = sphi 0, %s75
    %s79 = sphi 0, %s78
    %s95 = sphi 0, %s79
    %s103 = sphi 0, %s105
    %s106 = sphi 0, %s103
    %s107 = sphi 0, %s106
    %s123 = sphi 0, %s107
    %s127 = sphi 0, %s127
    %s129 = sphi 0, %s127
    %s130 = sphi 0, %s129
    %s144 = sphi 0, %s130
  $region4: #{attention_framework.1} parent=0 // loop_header_branch
    %14 = sbr.rel (%p12) target = $region8
  $region5: #{attention_framework.1} parent=0 // loop_body
    %s16 = ssub.s32 %s11, 1
    %s17 = ssub.s32 %s11, 2
    %s24 = sadd.s32 1, %s19
    %p25 = scmp.ge.s32.totalorder %s24, 1
    %s26 = scalar_select %p25, 0, %s24
    %s27 = sadd.s32 1, %s18
    %s28 = scalar_select %p25, %s27, %s18
    %p29 = scmp.ge.s32.totalorder %s28, 2
    %s30 = scalar_select %p29, 0, %s28
    %s32 = sadd.s32 %s31, 1
    %p35 = scmp.eq.s32.totalorder %s11, 1
    %p36 = scmp.ne.s32.totalorder %s31, %s33
    %p37 = scmp.eq.s32.totalorder %s11, 0
    %p38 = por %p36, %p37
    %p39 = scmp.ne.s32.totalorder %s31, %s33
    %p40 = scmp.eq.s32.totalorder %s16, 1
    %p41 = por %p39, %p40
    %p42 = scmp.ne.s32.totalorder %s33, %s34
    %p43 = scmp.eq.s32.totalorder %s16, 0
    %p44 = por %p42, %p43
    %p45 = scmp.ne.s32.totalorder %s33, %s34
    %p46 = scmp.eq.s32.totalorder %s17, 1
    %p47 = por %p45, %p46
    %p49 = scmp.ne.s32.totalorder %s34, %s48
    %p50 = scmp.eq.s32.totalorder %s17, 0
    %p51 = por %p49, %p50
    %s53 = sadd.s32 %s52, 1
    %p56 = scmp.eq.s32.totalorder %s11, 1
    %p57 = scmp.ne.s32.totalorder %s52, %s54
    %p58 = scmp.eq.s32.totalorder %s11, 0
    %p59 = por %p57, %p58
    %p60 = scmp.ne.s32.totalorder %s52, %s54
    %p61 = scmp.eq.s32.totalorder %s16, 1
    %p62 = por %p60, %p61
    %p63 = scmp.ne.s32.totalorder %s54, %s55
    %p64 = scmp.eq.s32.totalorder %s16, 0
    %p65 = por %p63, %p64
    %p66 = scmp.ne.s32.totalorder %s54, %s55
    %p67 = scmp.eq.s32.totalorder %s17, 1
    %p68 = por %p66, %p67
    %p70 = scmp.ne.s32.totalorder %s55, %s69
    %p71 = scmp.eq.s32.totalorder %s17, 0
    %p72 = por %p70, %p71
    %s73 = ssub.s32 %s19, %s26
    %p74 = scmp.eq.s32.totalorder %s73, 0
    %s76 = sadd.s32 %s75, 1
    %s77 = scalar_select %p74, %s75, %s76
    %p80 = pneg %p74
    %p81 = scmp.eq.s32.totalorder %s11, 1
    %p82 = por %p80, %p81
    %p83 = scmp.ne.s32.totalorder %s75, %s78
    %p84 = scmp.eq.s32.totalorder %s11, 0
    %p85 = por %p83, %p84
    %p86 = scmp.ne.s32.totalorder %s75, %s78
    %p87 = scmp.eq.s32.totalorder %s16, 1
    %p88 = por %p86, %p87
    %p89 = scmp.ne.s32.totalorder %s78, %s79
    %p90 = scmp.eq.s32.totalorder %s16, 0
    %p91 = por %p89, %p90
    %p92 = scmp.ne.s32.totalorder %s78, %s79
    %p93 = scmp.eq.s32.totalorder %s17, 1
    %p94 = por %p92, %p93
    %p96 = scmp.ne.s32.totalorder %s79, %s95
    %p97 = scmp.eq.s32.totalorder %s17, 0
    %p98 = por %p96, %p97
    %s99 = smul.u32 %s19, %s18
    %s100 = smul.u32 %s26, %s30
    %s101 = ssub.s32 %s99, %s100
    %p102 = scmp.eq.s32.totalorder %s101, 0
    %s104 = sadd.s32 %s103, 1
    %s105 = scalar_select %p102, %s103, %s104
    %p108 = pneg %p102
    %p109 = scmp.eq.s32.totalorder %s11, 1
    %p110 = por %p108, %p109
    %p111 = scmp.ne.s32.totalorder %s103, %s106
    %p112 = scmp.eq.s32.totalorder %s11, 0
    %p113 = por %p111, %p112
    %p114 = scmp.ne.s32.totalorder %s103, %s106
    %p115 = scmp.eq.s32.totalorder %s16, 1
    %p116 = por %p114, %p115
    %p117 = scmp.ne.s32.totalorder %s106, %s107
    %p118 = scmp.eq.s32.totalorder %s16, 0
    %p119 = por %p117, %p118
    %p120 = scmp.ne.s32.totalorder %s106, %s107
    %p121 = scmp.eq.s32.totalorder %s17, 1
    %p122 = por %p120, %p121
    %p124 = scmp.ne.s32.totalorder %s107, %s123
    %p125 = scmp.eq.s32.totalorder %s17, 0
    %p126 = por %p124, %p125
    %s128 = sadd.s32 %s127, 1
    %p131 = scmp.eq.s32.totalorder %s11, 1
    %p132 = scmp.ne.s32.totalorder %s127, %s129
    %p133 = scmp.eq.s32.totalorder %s11, 0
    %p134 = por %p132, %p133
    %p135 = scmp.ne.s32.totalorder %s127, %s129
    %p136 = scmp.eq.s32.totalorder %s16, 1
    %p137 = por %p135, %p136
    %p138 = scmp.ne.s32.totalorder %s129, %s130
    %p139 = scmp.eq.s32.totalorder %s16, 0
    %p140 = por %p138, %p139
    %p141 = scmp.ne.s32.totalorder %s129, %s130
    %p142 = scmp.eq.s32.totalorder %s17, 1
    %p143 = por %p141, %p142
    %p145 = scmp.ne.s32.totalorder %s130, %s144
    %p146 = scmp.eq.s32.totalorder %s17, 0
    %p147 = por %p145, %p146
    %p148 = scmp.le.s32.totalorder 1, %s11
    %p149 = scmp.lt.s32.totalorder %s11, 3
    %p150 = pnand %p148, %p149
    %p151 = pneg %p150
    // Predicated region
    $region9: #{attention_framework.1} parent=5 // pred_check
      _
    $region10: #{attention_framework.1} parent=5 // pred_check_branch
      %153 = sbr.rel (%p150) target = $region12
    $region11: #{attention_framework.1} parent=5 // pred_region
      %s154 = ssub.s32 %s11, 1
      // Predicated region
      $region13: #{attention_framework.1} parent=11 // pred_check
        %p155 = pneg %p44
      $region14: #{attention_framework.1} parent=11 // pred_check_branch
        %157 = sbr.rel (%p155) target = $region16
      $region15: #{attention_framework.1} parent=11 // pred_region
        _
      $region16: #{attention_framework.1} parent=11 // pred_fallthru
        _
      // Predicated region
      $region17: #{attention_framework.1} parent=11 // pred_check
        %p158 = pneg %p65
      $region18: #{attention_framework.1} parent=11 // pred_check_branch
        %160 = sbr.rel (%p158) target = $region20
      $region19: #{attention_framework.1} parent=11 // pred_region
        _
      $region20: #{attention_framework.1} parent=11 // pred_fallthru
        _
      // Predicated region
      $region21: #{attention_framework.1} parent=11 // pred_check
        %p161 = pneg %p91
      $region22: #{attention_framework.1} parent=11 // pred_check_branch
        %163 = sbr.rel (%p161) target = $region24
      $region23: #{attention_framework.1} parent=11 // pred_region
        %s164 = smul.u32 2, %s21
        %p165 = scmp.lt.s32.totalorder %s164, 1
        %s166 = scalar_select %p165, %s164, 1
        %s167 = smul.addr %s166, 8
        %s168 = scalar_lea.vmem %s2, %s167
        %s169 = smul.u32 2, %s21
      $region24: #{attention_framework.1} parent=11 // pred_fallthru
        _
    $region12: #{attention_framework.1} parent=5 // pred_fallthru
      _
    %p170 = scmp.lt.s32.totalorder %s11, 2
    // Predicated region
    $region25: #{attention_framework.1} parent=5 // pred_check
      %p171 = pneg %p170
    $region26: #{attention_framework.1} parent=5 // pred_check_branch
      %173 = sbr.rel (%p171) target = $region28
    $region27: #{attention_framework.1} parent=5 // pred_region
      _
    $region28: #{attention_framework.1} parent=5 // pred_fallthru
      _
    %p174 = scmp.le.s32.totalorder 1, %s11
    %p175 = scmp.lt.s32.totalorder %s11, 3
    %p176 = pnand %p174, %p175
    %p177 = pneg %p176
    // Predicated region
    $region29: #{attention_framework.1} parent=5 // pred_check
      _
    $region30: #{attention_framework.1} parent=5 // pred_check_branch
      %179 = sbr.rel (%p176) target = $region32
    $region31: #{attention_framework.1} parent=5 // pred_region
      %s180 = ssub.s32 %s11, 1
      %p181 = pneg %p44
      %p182 = pneg %p41
      %p183 = pneg %p65
      %p184 = pneg %p62
      %s185 = smul.u32 2, %s21
      %p186 = scmp.lt.s32.totalorder %s185, 1
      %s187 = scalar_select %p186, %s185, 1
      %s188 = smul.addr %s187, 8
      %s189 = scalar_lea.vmem %s2, %s188
      %p190 = pneg %p91
      %p191 = pneg %p88
      %p192 = pneg %p119
      %p193 = pneg %p116
      %s194 = smul.u32 %s21, %s20
      %s195 = smul.u32 2, %s194
      %p196 = scmp.lt.s32.totalorder %s195, 1
      %s197 = scalar_select %p196, %s195, 1
      %s198 = smul.addr %s197, 8
      %s199 = scalar_lea.vmem %s3, %s198
      %p200 = pneg %p140
      %p201 = pneg %p137
      %s202 = smul.u32 2, %s21
      %p203 = scmp.lt.s32.totalorder %s202, 1
      %s204 = scalar_select %p203, %s202, 1
      %s205 = smul.addr %s204, 8
      %s206 = scalar_lea.vmem %s2, %s205
      %s207 = smul.u32 2, %s21
      %s208 = smul.u32 %s21, %s20
      %s209 = smul.u32 2, %s208
      %p210 = scmp.lt.s32.totalorder %s209, 1
      %s211 = scalar_select %p210, %s209, 1
      %s212 = smul.addr %s211, 8
      %s213 = scalar_lea.vmem %s3, %s212
      %s214 = smul.u32 %s21, %s20
      %s215 = smul.u32 2, %s214
      %v216 = vld [vmem:[%s206] sm:$0xff]
      %v217 = vld [vmem:[%s206 + $0x8] sm:$0xff]
      %p218 = scmp.eq.s32.totalorder %s20, 0
      // Predicated region
      $region33: #{attention_framework.1} parent=31 // pred_check
        %p219 = pneg %p218
      $region34: #{attention_framework.1} parent=31 // pred_check_branch
        %221 = sbr.rel (%p219) target = $region36
      $region35: #{attention_framework.1} parent=31 // pred_region
        %p222 = scmp.eq.s32.totalorder %s21, 0
        // Predicated region
        $region37: #{attention_framework.1} parent=35 // pred_check
          %p223 = pneg %p222
        $region38: #{attention_framework.1} parent=35 // pred_check_branch
          %225 = sbr.rel (%p223) target = $region40
        $region39: #{attention_framework.1} parent=35 // pred_region
          %vm226 = vcmask 7168
          %227 = vst.msk [vmem:[#allocation2] sm:$0xff] %vm226, 0.0
          %228 = vst.msk [vmem:[#allocation3] sm:$0xff] %vm226, 0.0
        $region40: #{attention_framework.1} parent=35 // pred_fallthru
          _
        %v229 = vld [vmem:[%s0] sm:$0xff]
        %231 = vset.pattern.permute.xlu0 0
        %232 = vperm.xlu0 %231, %v229
        %v233 = vpop.permute.xlu0 %232
        %v235 = vlaneseq
        %v236 = vshrl.u32 %v235, 7
        %v237 = vsub.s32 0, %v236
        %v238 = vrot.slane %v216, %v237
        %v239 = vlaneseq
        %v240 = vshrl.u32 %v239, 7
        %v241 = vsub.s32 0, %v240
        %v242 = vrot.slane %v217, %v241
        %v243 = vmul.f32 %v233, %v238
        %v244 = vmul.f32 %v233, %v242
        %245 = vset.pattern.permute.xlu0 1
        %246 = vperm.xlu0 %245, %v229
        %v247 = vpop.permute.xlu0 %246
        %v249 = vlaneseq
        %v250 = vshrl.u32 %v249, 7
        %v251 = vsub.s32 1, %v250
        %v252 = vrot.slane %v216, %v251
        %v253 = vlaneseq
        %v254 = vshrl.u32 %v253, 7
        %v255 = vsub.s32 1, %v254
        %v256 = vrot.slane %v217, %v255
        %v257 = vmul.f32 %v247, %v252
        %v258 = vmul.f32 %v247, %v256
        %v259 = vadd.f32 %v243, %v257
        %v260 = vadd.f32 %v244, %v258
        %261 = vset.pattern.permute.xlu0 2
        %262 = vperm.xlu0 %261, %v229
        %v263 = vpop.permute.xlu0 %262
        %v265 = vlaneseq
        %v266 = vshrl.u32 %v265, 7
        %v267 = vsub.s32 2, %v266
        %v268 = vrot.slane %v216, %v267
        %v269 = vlaneseq
        %v270 = vshrl.u32 %v269, 7
        %v271 = vsub.s32 2, %v270
        %v272 = vrot.slane %v217, %v271
        %v273 = vmul.f32 %v263, %v268
        %v274 = vmul.f32 %v263, %v272
        %v275 = vadd.f32 %v259, %v273
        %v276 = vadd.f32 %v260, %v274
        %277 = vset.pattern.permute.xlu0 3
        %278 = vperm.xlu0 %277, %v229
        %v279 = vpop.permute.xlu0 %278
        %v281 = vlaneseq
        %v282 = vshrl.u32 %v281, 7
        %v283 = vsub.s32 3, %v282
        %v284 = vrot.slane %v216, %v283
        %v285 = vlaneseq
        %v286 = vshrl.u32 %v285, 7
        %v287 = vsub.s32 3, %v286
        %v288 = vrot.slane %v217, %v287
        %v289 = vmul.f32 %v279, %v284
        %v290 = vmul.f32 %v279, %v288
        %v291 = vadd.f32 %v275, %v289
        %v292 = vadd.f32 %v276, %v290
        %v293 = vld [vmem:[#allocation2] sm:$0xf]
        %vm294 = vcmask 1043456
        %v295 = vsel %vm294, %v291, 0.0
        %v296 = vsel %vm294, %v292, 0.0
        %v297 = vadd.f32 %v295, %v296
        %298 = vadd.xlane.f32.xlu0 %v297
        %v299 = vpop.xlane.xlu0 %298
        %v300 = vadd.f32 %v293, %v299
        %vm301 = vcmask 3072
        %302 = vst.msk [vmem:[#allocation2] sm:$0xf] %vm301, %v300
        %v303 = vld [vmem:[#allocation3] sm:$0xf]
        %v304 = vmul.f32 %v291, %v291
        %v305 = vmul.f32 %v292, %v292
        %v306 = vsel %vm294, %v304, 0.0
        %v307 = vsel %vm294, %v305, 0.0
        %v308 = vadd.f32 %v306, %v307
        %309 = vadd.xlane.f32.xlu0 %v308
        %v310 = vpop.xlane.xlu0 %309
        %v311 = vadd.f32 %v303, %v310
        %312 = vst.msk [vmem:[#allocation3] sm:$0xf] %vm301, %v311
        %313 = vset.pattern.permute.xlu0 4
        %314 = vperm.xlu0 %313, %v229
        %v315 = vpop.permute.xlu0 %314
        %v317 = vlaneseq
        %v318 = vshrl.u32 %v317, 7
        %v319 = vsub.s32 4, %v318
        %v320 = vrot.slane %v216, %v319
        %v321 = vlaneseq
        %v322 = vshrl.u32 %v321, 7
        %v323 = vsub.s32 4, %v322
        %v324 = vrot.slane %v217, %v323
        %v325 = vmul.f32 %v315, %v320
        %v326 = vmul.f32 %v315, %v324
        %327 = vset.pattern.permute.xlu0 5
        %328 = vperm.xlu0 %327, %v229
        %v329 = vpop.permute.xlu0 %328
        %v331 = vlaneseq
        %v332 = vshrl.u32 %v331, 7
        %v333 = vsub.s32 5, %v332
        %v334 = vrot.slane %v216, %v333
        %v335 = vlaneseq
        %v336 = vshrl.u32 %v335, 7
        %v337 = vsub.s32 5, %v336
        %v338 = vrot.slane %v217, %v337
        %v339 = vmul.f32 %v329, %v334
        %v340 = vmul.f32 %v329, %v338
        %v341 = vadd.f32 %v325, %v339
        %v342 = vadd.f32 %v326, %v340
        %343 = vset.pattern.permute.xlu0 6
        %344 = vperm.xlu0 %343, %v229
        %v345 = vpop.permute.xlu0 %344
        %v347 = vlaneseq
        %v348 = vshrl.u32 %v347, 7
        %v349 = vsub.s32 6, %v348
        %v350 = vrot.slane %v216, %v349
        %v351 = vlaneseq
        %v352 = vshrl.u32 %v351, 7
        %v353 = vsub.s32 6, %v352
        %v354 = vrot.slane %v217, %v353
        %v355 = vmul.f32 %v345, %v350
        %v356 = vmul.f32 %v345, %v354
        %v357 = vadd.f32 %v341, %v355
        %v358 = vadd.f32 %v342, %v356
        %359 = vset.pattern.permute.xlu0 7
        %360 = vperm.xlu0 %359, %v229
        %v361 = vpop.permute.xlu0 %360
        %v363 = vlaneseq
        %v364 = vshrl.u32 %v363, 7
        %v365 = vsub.s32 7, %v364
        %v366 = vrot.slane %v216, %v365
        %v367 = vlaneseq
        %v368 = vshrl.u32 %v367, 7
        %v369 = vsub.s32 7, %v368
        %v370 = vrot.slane %v217, %v369
        %v371 = vmul.f32 %v361, %v366
        %v372 = vmul.f32 %v361, %v370
        %v373 = vadd.f32 %v357, %v371
        %v374 = vadd.f32 %v358, %v372
        %v375 = vld [vmem:[#allocation2 + $0x4] sm:$0xf]
        %vm376 = vcmask 1047556
        %v377 = vsel %vm376, %v373, 0.0
        %v378 = vsel %vm376, %v374, 0.0
        %v379 = vadd.f32 %v377, %v378
        %380 = vadd.xlane.f32.xlu0 %v379
        %v381 = vpop.xlane.xlu0 %380
        %v383 = vrot.slane %v381, 4
        %v385 = vadd.f32 %v375, %v383
        %386 = vst.msk [vmem:[#allocation2 + $0x4] sm:$0xf] %vm301, %v385
        %v387 = vld [vmem:[#allocation3 + $0x4] sm:$0xf]
        %v388 = vmul.f32 %v373, %v373
        %v389 = vmul.f32 %v374, %v374
        %v390 = vsel %vm376, %v388, 0.0
        %v391 = vsel %vm376, %v389, 0.0
        %v392 = vadd.f32 %v390, %v391
        %393 = vadd.xlane.f32.xlu0 %v392
        %v394 = vpop.xlane.xlu0 %393
        %v396 = vrot.slane %v394, 4
        %v398 = vadd.f32 %v387, %v396
        %399 = vst.msk [vmem:[#allocation3 + $0x4] sm:$0xf] %vm301, %v398
      $region36: #{attention_framework.1} parent=31 // pred_fallthru
        _
      %p400 = scmp.eq.s32.totalorder %s20, 1
      %p401 = scmp.eq.s32.totalorder %s21, 0
      %p402 = pnand %p400, %p401
      %p403 = pneg %p402
      // Predicated region
      $region41: #{attention_framework.1} parent=31 // pred_check
        _
      $region42: #{attention_framework.1} parent=31 // pred_check_branch
        %405 = sbr.rel (%p402) target = $region44
      $region43: #{attention_framework.1} parent=31 // pred_region
        %v406 = vld [vmem:[#allocation2] sm:$0xff]
        %v407 = vld [vmem:[#allocation3] sm:$0xff]
        %v409 = vrot.slane %v406, 4
        %v411 = vadd.f32 %v406, %v409
        %v413 = vrot.slane %v407, 4
        %v415 = vadd.f32 %v407, %v413
        %v416 = vmul.f32 %v411, 0.001953125
        %v417 = vmul.f32 %v415, 0.001953125
        %v418 = vmul.f32 %v416, %v416
        %v419 = vsub.f32 %v417, %v418
        %v420 = vmax.f32 %v419, 0.0
        %v421 = vld [vmem:[%s1] sm:$0xf]
        %v422 = vadd.f32 %v420, 1e-05
        %v423 = vrsqrt.pop %v422
        %v424 = vmul.f32 %v421, %v423
        %v425 = vmul.f32 %v416, %v424
        %427 = vrot.lane.b32.xlu0 %v425, 1
        %v428 = vpop.permute.xlu0 %427
        %v430 = vsub.f32 %v421, %v428
        %v431 = vld [vmem:[%s0] sm:$0xff]
        %433 = vrot.lane.b32.xlu0 %v430, 127
        %v434 = vpop.permute.xlu0 %433
        %vm436 = vcmask 3072
        %437 = vst.msk [vmem:[#allocation5] sm:$0xf] %vm436, %v434
        %439 = vset.pattern.permute.xlu0 0
        %440 = vperm.xlu0 %439, %v424
        %v441 = vpop.permute.xlu0 %440
        %v443 = vmul.f32 %v431, %v441
        %vm444 = vcmask 60416
        %445 = vst.msk [vmem:[#allocation4] sm:$0xf] %vm444, %v443
        %446 = vst.msk [vmem:[#allocation5 + $0x4] sm:$0xf] %vm436, %v434
        %v447 = vrot.slane %v441, 4
        %v449 = vmul.f32 %v431, %v447
        %vm450 = vcmask 64516
        %451 = vst.msk [vmem:[#allocation4] sm:$0xf0] %vm450, %v449
        %vm452 = vcmask 7168
        %453 = vst.msk [vmem:[%s4] sm:$0xff] %vm452, 0.0
      $region44: #{attention_framework.1} parent=31 // pred_fallthru
        _
      // Predicated region
      $region45: #{attention_framework.1} parent=31 // pred_check
        %p454 = pneg %p400
      $region46: #{attention_framework.1} parent=31 // pred_check_branch
        %456 = sbr.rel (%p454) target = $region48
      $region47: #{attention_framework.1} parent=31 // pred_region
        %v457 = vld [vmem:[#allocation4] sm:$0xff]
        %459 = vset.pattern.permute.xlu0 0
        %460 = vperm.xlu0 %459, %v457
        %v461 = vpop.permute.xlu0 %460
        %v463 = vlaneseq
        %v464 = vshrl.u32 %v463, 7
        %v465 = vsub.s32 0, %v464
        %v466 = vrot.slane %v216, %v465
        %v467 = vlaneseq
        %v468 = vshrl.u32 %v467, 7
        %v469 = vsub.s32 0, %v468
        %v470 = vrot.slane %v217, %v469
        %v471 = vmul.f32 %v461, %v466
        %v472 = vmul.f32 %v461, %v470
        %473 = vset.pattern.permute.xlu0 1
        %474 = vperm.xlu0 %473, %v457
        %v475 = vpop.permute.xlu0 %474
        %v477 = vlaneseq
        %v478 = vshrl.u32 %v477, 7
        %v479 = vsub.s32 1, %v478
        %v480 = vrot.slane %v216, %v479
        %v481 = vlaneseq
        %v482 = vshrl.u32 %v481, 7
        %v483 = vsub.s32 1, %v482
        %v484 = vrot.slane %v217, %v483
        %v485 = vmul.f32 %v475, %v480
        %v486 = vmul.f32 %v475, %v484
        %v487 = vadd.f32 %v471, %v485
        %v488 = vadd.f32 %v472, %v486
        %489 = vset.pattern.permute.xlu0 2
        %490 = vperm.xlu0 %489, %v457
        %v491 = vpop.permute.xlu0 %490
        %v493 = vlaneseq
        %v494 = vshrl.u32 %v493, 7
        %v495 = vsub.s32 2, %v494
        %v496 = vrot.slane %v216, %v495
        %v497 = vlaneseq
        %v498 = vshrl.u32 %v497, 7
        %v499 = vsub.s32 2, %v498
        %v500 = vrot.slane %v217, %v499
        %v501 = vmul.f32 %v491, %v496
        %v502 = vmul.f32 %v491, %v500
        %v503 = vadd.f32 %v487, %v501
        %v504 = vadd.f32 %v488, %v502
        %505 = vset.pattern.permute.xlu0 3
        %506 = vperm.xlu0 %505, %v457
        %v507 = vpop.permute.xlu0 %506
        %v509 = vlaneseq
        %v510 = vshrl.u32 %v509, 7
        %v511 = vsub.s32 3, %v510
        %v512 = vrot.slane %v216, %v511
        %v513 = vlaneseq
        %v514 = vshrl.u32 %v513, 7
        %v515 = vsub.s32 3, %v514
        %v516 = vrot.slane %v217, %v515
        %v517 = vmul.f32 %v507, %v512
        %v518 = vmul.f32 %v507, %v516
        %v519 = vadd.f32 %v503, %v517
        %v520 = vadd.f32 %v504, %v518
        %v521 = vld [vmem:[#allocation5] sm:$0xf]
        %523 = vset.pattern.permute.xlu0 0
        %524 = vperm.xlu0 %523, %v521
        %v525 = vpop.permute.xlu0 %524
        %v527 = vadd.f32 %v519, %v525
        %v528 = vadd.f32 %v520, %v525
        %v529 = vmax.f32 %v527, 0.0
        %v530 = vmax.f32 %v528, 0.0
        %531 = vst [vmem:[%s213] sm:$0xf] %v529
        %532 = vst [vmem:[%s213 + $0x8] sm:$0xf] %v530
        %v533 = vld [vmem:[%s4] sm:$0xf]
        %v534 = vmul.f32 %v216, %v529
        %v535 = vmul.f32 %v217, %v530
        %vm536 = vcmask 1043456
        %v537 = vsel %vm536, %v534, 0.0
        %v538 = vsel %vm536, %v535, 0.0
        %v539 = vadd.f32 %v537, %v538
        %540 = vadd.xlane.f32.xlu0 %v539
        %v541 = vpop.xlane.xlu0 %540
        %v542 = vmul.f32 %v541, 0.00390625
        %v543 = vadd.f32 %v533, %v542
        %vm544 = vcmask 3072
        %545 = vst.msk [vmem:[%s4] sm:$0xf] %vm544, %v543
        %546 = vset.pattern.permute.xlu0 4
        %547 = vperm.xlu0 %546, %v457
        %v548 = vpop.permute.xlu0 %547
        %v550 = vlaneseq
        %v551 = vshrl.u32 %v550, 7
        %v552 = vsub.s32 4, %v551
        %v553 = vrot.slane %v216, %v552
        %v554 = vlaneseq
        %v555 = vshrl.u32 %v554, 7
        %v556 = vsub.s32 4, %v555
        %v557 = vrot.slane %v217, %v556
        %v558 = vmul.f32 %v548, %v553
        %v559 = vmul.f32 %v548, %v557
        %560 = vset.pattern.permute.xlu0 5
        %561 = vperm.xlu0 %560, %v457
        %v562 = vpop.permute.xlu0 %561
        %v564 = vlaneseq
        %v565 = vshrl.u32 %v564, 7
        %v566 = vsub.s32 5, %v565
        %v567 = vrot.slane %v216, %v566
        %v568 = vlaneseq
        %v569 = vshrl.u32 %v568, 7
        %v570 = vsub.s32 5, %v569
        %v571 = vrot.slane %v217, %v570
        %v572 = vmul.f32 %v562, %v567
        %v573 = vmul.f32 %v562, %v571
        %v574 = vadd.f32 %v558, %v572
        %v575 = vadd.f32 %v559, %v573
        %576 = vset.pattern.permute.xlu0 6
        %577 = vperm.xlu0 %576, %v457
        %v578 = vpop.permute.xlu0 %577
        %v580 = vlaneseq
        %v581 = vshrl.u32 %v580, 7
        %v582 = vsub.s32 6, %v581
        %v583 = vrot.slane %v216, %v582
        %v584 = vlaneseq
        %v585 = vshrl.u32 %v584, 7
        %v586 = vsub.s32 6, %v585
        %v587 = vrot.slane %v217, %v586
        %v588 = vmul.f32 %v578, %v583
        %v589 = vmul.f32 %v578, %v587
        %v590 = vadd.f32 %v574, %v588
        %v591 = vadd.f32 %v575, %v589
        %592 = vset.pattern.permute.xlu0 7
        %593 = vperm.xlu0 %592, %v457
        %v594 = vpop.permute.xlu0 %593
        %v596 = vlaneseq
        %v597 = vshrl.u32 %v596, 7
        %v598 = vsub.s32 7, %v597
        %v599 = vrot.slane %v216, %v598
        %v600 = vlaneseq
        %v601 = vshrl.u32 %v600, 7
        %v602 = vsub.s32 7, %v601
        %v603 = vrot.slane %v217, %v602
        %v604 = vmul.f32 %v594, %v599
        %v605 = vmul.f32 %v594, %v603
        %v606 = vadd.f32 %v590, %v604
        %v607 = vadd.f32 %v591, %v605
        %v608 = vld [vmem:[#allocation5 + $0x4] sm:$0xf]
        %610 = vset.pattern.permute.xlu0 0
        %611 = vperm.xlu0 %610, %v608
        %v612 = vpop.permute.xlu0 %611
        %v613 = vrot.slane %v612, 4
        %v615 = vadd.f32 %v606, %v613
        %v616 = vadd.f32 %v607, %v613
        %v617 = vmax.f32 %v615, 0.0
        %v618 = vmax.f32 %v616, 0.0
        %619 = vst [vmem:[%s213] sm:$0xf0] %v617
        %620 = vst [vmem:[%s213 + $0x8] sm:$0xf0] %v618
        %v621 = vld [vmem:[%s4 + $0x4] sm:$0xf]
        %v622 = vmul.f32 %v216, %v617
        %v623 = vmul.f32 %v217, %v618
        %vm624 = vcmask 1047556
        %v625 = vsel %vm624, %v622, 0.0
        %v626 = vsel %vm624, %v623, 0.0
        %v627 = vadd.f32 %v625, %v626
        %628 = vadd.xlane.f32.xlu0 %v627
        %v629 = vpop.xlane.xlu0 %628
        %v630 = vmul.f32 %v629, 0.00390625
        %v632 = vrot.slane %v630, 4
        %v634 = vadd.f32 %v621, %v632
        %635 = vst.msk [vmem:[%s4 + $0x4] sm:$0xf] %vm544, %v634
      $region48: #{attention_framework.1} parent=31 // pred_fallthru
        _
      %s636 = smul.u32 %s21, %s20
      %s637 = smul.u32 2, %s636
      %p638 = scmp.lt.s32.totalorder %s637, 1
      %s639 = scalar_select %p638, %s637, 1
      %s640 = smul.addr %s639, 8
      %s641 = scalar_lea.vmem %s3, %s640
      // Predicated region
      $region49: #{attention_framework.1} parent=31 // pred_check
        %p642 = pneg %p116
      $region50: #{attention_framework.1} parent=31 // pred_check_branch
        %644 = sbr.rel (%p642) target = $region52
      $region51: #{attention_framework.1} parent=31 // pred_region
        %s645 = smul.u32 %s21, %s20
        %s646 = smul.u32 2, %s645
      $region52: #{attention_framework.1} parent=31 // pred_fallthru
        _
      // Predicated region
      $region53: #{attention_framework.1} parent=31 // pred_check
        %p647 = pneg %p137
      $region54: #{attention_framework.1} parent=31 // pred_check_branch
        %649 = sbr.rel (%p647) target = $region56
      $region55: #{attention_framework.1} parent=31 // pred_region
        _
      $region56: #{attention_framework.1} parent=31 // pred_fallthru
        _
      // Predicated region
      $region57: #{attention_framework.1} parent=31 // pred_check
        %p650 = pneg %p137
      $region58: #{attention_framework.1} parent=31 // pred_check_branch
        %652 = sbr.rel (%p650) target = $region60
      $region59: #{attention_framework.1} parent=31 // pred_region
        _
      $region60: #{attention_framework.1} parent=31 // pred_fallthru
        _
    $region32: #{attention_framework.1} parent=5 // pred_fallthru
      _
    %p653 = scmp.le.s32.totalorder 2, %s11
    // Predicated region
    $region61: #{attention_framework.1} parent=5 // pred_check
      %p654 = pneg %p653
    $region62: #{attention_framework.1} parent=5 // pred_check_branch
      %656 = sbr.rel (%p654) target = $region64
    $region63: #{attention_framework.1} parent=5 // pred_region
      %s657 = ssub.s32 %s11, 2
      // Predicated region
      $region65: #{attention_framework.1} parent=63 // pred_check
        %p658 = pneg %p122
      $region66: #{attention_framework.1} parent=63 // pred_check_branch
        %660 = sbr.rel (%p658) target = $region68
      $region67: #{attention_framework.1} parent=63 // pred_region
        %s661 = smul.u32 %s23, %s22
        %s662 = smul.u32 2, %s661
        %p663 = scmp.lt.s32.totalorder %s662, 1
        %s664 = scalar_select %p663, %s662, 1
        %s665 = smul.addr %s664, 8
        %s666 = scalar_lea.vmem %s3, %s665
      $region68: #{attention_framework.1} parent=63 // pred_fallthru
        _
    $region64: #{attention_framework.1} parent=5 // pred_fallthru
      _
  $region6: #{attention_framework.1} parent=0 // loop_footer
    %s15 = sadd.s32 1, %s11
  $region7: #{attention_framework.1} parent=0 // loop_footer_branch
    %10 = sbr.rel target = $region3
  $region8: #{attention_framework.1} parent=0 // loop_exit
    _

</llo_original>
